<compile_context>
chip_gen: v6e
topology: v6e:2x2x1
jax: 0.10.0
libtpu: 0.0.40
codegen_flags: <defaults>
</compile_context>

<pallas_src>
import functools

import jax
import jax.numpy as jnp
from jax.experimental import pallas as pl
from jax.experimental.pallas import tpu as pltpu

MODEL_SIZE = 32   # "modelSize" constructor arg
HIDDEN = 50
OUT = 10
OUT_SUB = 16      # OUT padded to a sublane-friendly 16 (output lives on sublanes)


def _round_up(n, m):
    return (n + m - 1) // m * m


def fused_affine_sigmoid_kernel(x_ref, w_ref, b_ref, o_ref):
    # x_ref: (bm, MODEL_SIZE)      activation tile (pipelined along the batch)
    # w_ref: (OUT_SUB, MODEL_SIZE) folded W^T, VMEM-resident
    # b_ref: (OUT_SUB, 1)          folded bias (f32), VMEM-resident
    # o_ref: (OUT_SUB, bm)         transposed, lane-dense output tile
    y = jnp.dot(w_ref[...], x_ref[...].T,              # single MXU pass, f32 acc
                preferred_element_type=jnp.float32)
    y = y + b_ref[...]                                 # (OUT_SUB, 1) lane-broadcast
    o_ref[...] = jax.nn.sigmoid(y).astype(o_ref.dtype)  # exp on the EUP slot


def fold_params(w1, b1, w2, b2, compute_dtype=jnp.bfloat16):
    """Fold fc1∘fc2 into one affine map, transpose so OUT sits on sublanes,
    pad OUT 10->16.  Weights are static: call this ONCE, outside the hot path."""
    compute_dtype = jnp.dtype(compute_dtype)
    w = jnp.dot(w1, w2, preferred_element_type=jnp.float32)        # (MODEL_SIZE, OUT)
    b = jnp.dot(b1, w2, preferred_element_type=jnp.float32) + b2   # (OUT,)
    w_t = jnp.zeros((OUT_SUB, MODEL_SIZE), jnp.float32).at[:OUT, :].set(w.T)
    b_t = jnp.zeros((OUT_SUB, 1), jnp.float32).at[:OUT, 0].set(b)
    return w_t.astype(compute_dtype), b_t              # bias / accumulation stay f32


@functools.partial(jax.jit, static_argnames=("block_b",))
def starting_network_folded(x, w_t, b_t, *, block_b=8192):
    """Forward pass on pre-folded params.  x: (B, MODEL_SIZE).  Returns (B, OUT) f32."""
    B, D = x.shape
    assert D == w_t.shape[1]
    compute_dtype = w_t.dtype

    x_in = x.astype(compute_dtype)

    # batch tile: multiple of 128 (batch sits on the LANES of the output tile)
    bm = min(_round_up(block_b, 128), _round_up(B, 128))
    Bp = _round_up(B, bm)
    if Bp != B:
        x_in = jnp.pad(x_in, ((0, Bp - B), (0, 0)))

    itemsize = jnp.dtype(compute_dtype).itemsize
    cost = pl.CostEstimate(
        flops=2 * Bp * D * OUT_SUB,
        transcendentals=Bp * OUT_SUB,
        bytes_accessed=(Bp * D * itemsize              # x read
                        + OUT_SUB * D * itemsize       # folded weight
                        + OUT_SUB * 4                  # folded bias
                        + OUT_SUB * Bp * 4),           # output writeback
    )

    out = pl.pallas_call(
        fused_affine_sigmoid_kernel,
        out_shape=jax.ShapeDtypeStruct((OUT_SUB, Bp), jnp.float32),
        grid_spec=pltpu.PrefetchScalarGridSpec(
            num_scalar_prefetch=0,
            grid=(Bp // bm,),
            in_specs=[
                pl.BlockSpec((bm, D), lambda i: (i, 0)),        # x tile (pipelined)
                pl.BlockSpec((OUT_SUB, D), lambda i: (0, 0)),   # folded W^T, resident
                pl.BlockSpec((OUT_SUB, 1), lambda i: (0, 0)),   # folded bias, resident
            ],
            out_specs=pl.BlockSpec((OUT_SUB, bm), lambda i: (0, i)),
        ),
        compiler_params=pltpu.CompilerParams(
            dimension_semantics=("parallel",),   # shard batch tiles across TCs on v7x
        ),
        cost_estimate=cost,
    )(x_in, w_t, b_t)

    # strip sublane padding (10 of 16) + batch padding; return (B, OUT)
    return out[:OUT, :B].T


def starting_network(x, w1, b1, w2, b2, *, block_b=8192, compute_dtype=jnp.bfloat16):
    """Drop-in convenience wrapper: folds the (static) weights then runs the kernel."""
    w_t, b_t = fold_params(w1, b1, w2, b2, compute_dtype)
    return starting_network_folded(x, w_t, b_t, block_b=block_b)


def starting_network_ref(x, w1, b1, w2, b2):
    """Pure-JAX reference (unfused two-layer form)."""
    return jax.nn.sigmoid((x @ w1 + b1) @ w2 + b2)


def init_params(key):
    """Deterministic init mirroring nn.Linear's U(-1/sqrt(fan_in), 1/sqrt(fan_in))."""
    k1, k2, k3, k4 = jax.random.split(key, 4)
    bound1 = 1.0 / jnp.sqrt(MODEL_SIZE)
    bound2 = 1.0 / jnp.sqrt(HIDDEN)
    # Stored already transposed: (in, out)
    w1 = jax.random.uniform(k1, (MODEL_SIZE, HIDDEN), jnp.float32, -bound1, bound1)
    b1 = jax.random.uniform(k2, (HIDDEN,), jnp.float32, -bound1, bound1)
    w2 = jax.random.uniform(k3, (HIDDEN, OUT), jnp.float32, -bound2, bound2)
    b2 = jax.random.uniform(k4, (OUT,), jnp.float32, -bound2, bound2)
    return w1, b1, w2, b2


if __name__ == "__main__":
    key = jax.random.PRNGKey(0)
    kx, kx2, kp = jax.random.split(key, 3)

    w1, b1, w2, b2 = init_params(kp)

    # --- small-shape check, f32 storage path (tight tolerance) ---------------
    B = 8
    x = jax.random.normal(kx, (B, MODEL_SIZE), jnp.float32)
    ref = starting_network_ref(x, w1, b1, w2, b2)

    out_f32 = jax.block_until_ready(
        starting_network(x, w1, b1, w2, b2, compute_dtype=jnp.float32))
    assert out_f32.shape == (B, OUT)
    assert jnp.allclose(out_f32, ref, atol=5e-5, rtol=1e-5), \
        float(jnp.max(jnp.abs(out_f32 - ref)))

    # --- default path: bf16 storage for x / folded weight, f32 accumulation --
    out_bf16 = jax.block_until_ready(starting_network(x, w1, b1, w2, b2))
    assert out_bf16.shape == (B, OUT)
    assert jnp.allclose(out_bf16, ref, atol=2e-2, rtol=2e-2)

    # --- ragged batch + multi-tile grid (exercises padding + batch pipeline) -
    B2 = 300
    x2 = jax.random.normal(kx2, (B2, MODEL_SIZE), jnp.float32)
    ref2 = starting_network_ref(x2, w1, b1, w2, b2)
    w_t32, b_t32 = fold_params(w1, b1, w2, b2, jnp.float32)   # fold hoisted out
    out2 = jax.block_until_ready(
        starting_network_folded(x2, w_t32, b_t32, block_b=128))
    assert out2.shape == (B2, OUT)
    assert jnp.allclose(out2, ref2, atol=5e-5, rtol=1e-5)

    print("KERNEL_OK")
</pallas_src>

<mosaic_0001>
module attributes {stable_mosaic.version = 11 : i64} {
  func.func @fused_affine_sigmoid_kernel(%arg0: i32, %arg1: memref<128x32xf32, #tpu.memory_space<vmem>>, %arg2: memref<16x32xf32, #tpu.memory_space<vmem>>, %arg3: memref<16x1xf32, #tpu.memory_space<vmem>>, %arg4: memref<16x128xf32, #tpu.memory_space<vmem>>) attributes {dimension_semantics = [#tpu.dimension_semantics<parallel>], iteration_bounds = array<i64: 1>, scalar_prefetch = 0 : i64, scratch_operands = 0 : i64, tpu.core_type = #tpu.core_type<tc>, window_params = [{transform_indices = @transform_0, window_bounds = array<i64: 128, 32>}, {pipeline_mode = #tpu.pipeline_mode<synchronous>, transform_indices = @transform_1, window_bounds = array<i64: 16, 32>}, {pipeline_mode = #tpu.pipeline_mode<synchronous>, transform_indices = @transform_2, window_bounds = array<i64: 16, 1>}, {transform_indices = @transform_3, window_bounds = array<i64: 16, 128>}]} {
    %c0 = arith.constant 0 : index
    %c0_0 = arith.constant 0 : index
    %0 = vector.load %arg2[%c0, %c0_0] : memref<16x32xf32, #tpu.memory_space<vmem>>, vector<16x32xf32>
    %c0_1 = arith.constant 0 : index
    %c0_2 = arith.constant 0 : index
    %1 = vector.load %arg1[%c0_1, %c0_2] : memref<128x32xf32, #tpu.memory_space<vmem>>, vector<128x32xf32>
    %2 = tpu.transpose %1, [1, 0] : vector<128x32xf32> -> vector<32x128xf32>
    %cst = arith.constant dense<0.000000e+00> : vector<16x128xf32>
    %3 = tpu.matmul %0, %2, %cst {dimension_numbers = #tpu.dot_dimension_numbers<[1], [0], [0], [1], [0, 0, 1, 1], [], []>} : vector<16x32xf32>, vector<32x128xf32>, vector<16x128xf32> -> vector<16x128xf32>
    %c0_3 = arith.constant 0 : index
    %c0_4 = arith.constant 0 : index
    %4 = vector.load %arg3[%c0_3, %c0_4] : memref<16x1xf32, #tpu.memory_space<vmem>>, vector<16x1xf32>
    %5 = vector.broadcast %4 : vector<16x1xf32> to vector<16x128xf32>
    %6 = arith.addf %3, %5 : vector<16x128xf32>
    %7 = arith.negf %6 : vector<16x128xf32>
    %8 = math.exp %7 : vector<16x128xf32>
    %cst_5 = arith.constant 1.000000e+00 : f32
    %9 = vector.broadcast %cst_5 : f32 to vector<16x128xf32>
    %10 = arith.addf %9, %8 : vector<16x128xf32>
    %11 = arith.divf %9, %10 : vector<16x128xf32>
    %c0_6 = arith.constant 0 : index
    %c0_7 = arith.constant 0 : index
    %12 = vector.load %arg4[%c0_6, %c0_7] : memref<16x128xf32, #tpu.memory_space<vmem>>, vector<16x128xf32>
    tpu.vector_store %arg4[%c0_6, %c0_7], %11 {strides = array<i32>} : memref<16x128xf32, #tpu.memory_space<vmem>>, vector<16x128xf32>,
    return
  }
  func.func @transform_0(%arg0: i32) -> (i32, i32) {
    %c0_i32 = arith.constant 0 : i32
    %c0_i32_0 = arith.constant 0 : i32
    return %arg0, %c0_i32 : i32, i32
  }
  func.func @transform_1(%arg0: i32) -> (i32, i32) {
    %c0_i32 = arith.constant 0 : i32
    %c0_i32_0 = arith.constant 0 : i32
    %c0_i32_1 = arith.constant 0 : i32
    return %c0_i32, %c0_i32_0 : i32, i32
  }
  func.func @transform_2(%arg0: i32) -> (i32, i32) {
    %c0_i32 = arith.constant 0 : i32
    %c0_i32_0 = arith.constant 0 : i32
    %c0_i32_1 = arith.constant 0 : i32
    return %c0_i32, %c0_i32_0 : i32, i32
  }
  func.func @transform_3(%arg0: i32) -> (i32, i32) {
    %c0_i32 = arith.constant 0 : i32
    %c0_i32_0 = arith.constant 0 : i32
    return %c0_i32, %arg0 : i32, i32
  }
}

</mosaic_0001>

<llo_original>
// kernel: starting_network_folded.1
$region0: #{starting_network_folded.1}
  #allocation0 [shape = 'u32[]', space=smem, size = 0x4, offset = 0x4, fixed_abs, tag = 'smem constant byte address 0x4 - core index']
  #allocation1 [shape = 'u32[144,128]{1,0:T(1,128)}', space=vmem, size = 0x12000, scoped, tag = 'internal scratch']
  %s0 = inlined_call_operand.vmem [shape: f32[128,32], index: 0, kind: input, shape index: {}]
  %s1 = inlined_call_operand.vmem [shape: f32[16,32], index: 1, kind: input, shape index: {}]
  %s2 = inlined_call_operand.vmem [shape: f32[16,1], index: 2, kind: input, shape index: {}]
  %s3 = inlined_call_operand.vmem [shape: f32[16,128], index: 3, kind: output, shape index: {}]
  %s4 = sld [smem:[#allocation0]]
  $region22: #{starting_network_folded.1} parent=0
    _
  %s6 = ssub.s32 1, %s4
  %s7 = scalar_select 0, %s6, %s4
  // Predicated region
  $region2: #{starting_network_folded.1} parent=0 // pred_check
    _
  $region3: #{starting_network_folded.1} parent=0 // pred_check_branch
    %9 = sbr.rel (0) target = $region5
  $region4: #{starting_network_folded.1} parent=0 // pred_region
    _
  $region5: #{starting_network_folded.1} parent=0 // pred_fallthru
    _
  // Predicated region
  $region6: #{starting_network_folded.1} parent=0 // pred_check
    _
  $region7: #{starting_network_folded.1} parent=0 // pred_check_branch
    %11 = sbr.rel (0) target = $region9
  $region8: #{starting_network_folded.1} parent=0 // pred_region
    _
  $region9: #{starting_network_folded.1} parent=0 // pred_fallthru
    _
  // Predicated region
  $region10: #{starting_network_folded.1} parent=0 // pred_check
    _
  $region11: #{starting_network_folded.1} parent=0 // pred_check_branch
    %13 = sbr.rel (0) target = $region13
  $region12: #{starting_network_folded.1} parent=0 // pred_region
    _
  $region13: #{starting_network_folded.1} parent=0 // pred_fallthru
    _
  %v14 = vld [vmem:[%s1] sm:$0xff]
  %v15 = vld [vmem:[%s1 + $0x8] sm:$0xff]
  %v16 = vld [vmem:[%s0] sm:$0xff]
  %v17 = vld [vmem:[%s0 + $0x8] sm:$0xff]
  %v18 = vld [vmem:[%s0 + $0x10] sm:$0xff]
  %v19 = vld [vmem:[%s0 + $0x18] sm:$0xff]
  %v20 = vld [vmem:[%s0 + $0x20] sm:$0xff]
  %v21 = vld [vmem:[%s0 + $0x28] sm:$0xff]
  %v22 = vld [vmem:[%s0 + $0x30] sm:$0xff]
  %v23 = vld [vmem:[%s0 + $0x38] sm:$0xff]
  %v24 = vld [vmem:[%s0 + $0x40] sm:$0xff]
  %v25 = vld [vmem:[%s0 + $0x48] sm:$0xff]
  %v26 = vld [vmem:[%s0 + $0x50] sm:$0xff]
  %v27 = vld [vmem:[%s0 + $0x58] sm:$0xff]
  %v28 = vld [vmem:[%s0 + $0x60] sm:$0xff]
  %v29 = vld [vmem:[%s0 + $0x68] sm:$0xff]
  %v30 = vld [vmem:[%s0 + $0x70] sm:$0xff]
  %v31 = vld [vmem:[%s0 + $0x78] sm:$0xff]
  %v32 = vld [vmem:[%s2] sm:$0xff]
  %v33 = vld [vmem:[%s2 + $0x8] sm:$0xff]
  %35 = vset.pattern.permute.xlu0 0
  %36 = vperm.xlu0 %35, %v32
  %v37 = vpop.permute.xlu0 %36
  %40 = vset.pattern.permute.xlu0 0
  %41 = vperm.xlu0 %40, %v33
  %v42 = vpop.permute.xlu0 %41
  %vm44 = vcmask 261120
  %v46 = vsel %vm44, %v14, 0
  %v49 = vsel %vm44, %v15, 0
  %v52 = vsel %vm44, %v16, 0
  %v55 = vsel %vm44, %v17, 0
  %v58 = vsel %vm44, %v18, 0
  %v61 = vsel %vm44, %v19, 0
  %v64 = vsel %vm44, %v20, 0
  %v67 = vsel %vm44, %v21, 0
  %v70 = vsel %vm44, %v22, 0
  %v73 = vsel %vm44, %v23, 0
  %v76 = vsel %vm44, %v24, 0
  %v79 = vsel %vm44, %v25, 0
  %v82 = vsel %vm44, %v26, 0
  %v85 = vsel %vm44, %v27, 0
  %v88 = vsel %vm44, %v28, 0
  %v91 = vsel %vm44, %v29, 0
  %v94 = vsel %vm44, %v30, 0
  %v97 = vsel %vm44, %v31, 0
  %99 = vmatprep.subr.mxu0 0.0
  %100 = vmatpush1.xpose.msra.mxu0 %v97
  %101 = vmatprep.subr.mxu0 0.0
  %102 = vmatpush1.xpose.msra.mxu0 %v94
  %103 = vmatprep.subr.mxu0 0.0
  %104 = vmatpush1.xpose.msra.mxu0 %v91
  %105 = vmatprep.subr.mxu0 0.0
  %106 = vmatpush1.xpose.msra.mxu0 %v88
  %107 = vmatprep.subr.mxu0 0.0
  %108 = vmatpush1.xpose.msra.mxu0 %v85
  %109 = vmatprep.subr.mxu0 0.0
  %110 = vmatpush1.xpose.msra.mxu0 %v82
  %111 = vmatprep.subr.mxu0 0.0
  %112 = vmatpush1.xpose.msra.mxu0 %v79
  %113 = vmatprep.subr.mxu0 0.0
  %114 = vmatpush1.xpose.msra.mxu0 %v76
  %115 = vmatprep.subr.mxu0 0.0
  %116 = vmatpush1.xpose.msra.mxu0 %v73
  %117 = vmatprep.subr.mxu0 0.0
  %118 = vmatpush1.xpose.msra.mxu0 %v70
  %119 = vmatprep.subr.mxu0 0.0
  %120 = vmatpush1.xpose.msra.mxu0 %v67
  %121 = vmatprep.subr.mxu0 0.0
  %122 = vmatpush1.xpose.msra.mxu0 %v64
  %123 = vmatprep.subr.mxu0 0.0
  %124 = vmatpush1.xpose.msra.mxu0 %v61
  %125 = vmatprep.subr.mxu0 0.0
  %126 = vmatpush1.xpose.msra.mxu0 %v58
  %127 = vmatprep.subr.mxu0 0.0
  %128 = vmatpush1.xpose.msra.mxu0 %v55
  %129 = vmatprep.subr.mxu0 0.0
  %130 = vmatpush1.xpose.msra.mxu0 %v52
  %131 = vmatprep.subr.mxu0 0.0
  %132 = vmatpush2.xpose.msra.mxu0 0.0
  %133 = vmatprep.subr.mxu0 0.0
  %134 = vmatpush2.xpose.msra.mxu0 0.0
  %135 = vmatprep.subr.mxu0 0.0
  %136 = vmatpush2.xpose.msra.mxu0 0.0
  %137 = vmatprep.subr.mxu0 0.0
  %138 = vmatpush2.xpose.msra.mxu0 0.0
  %139 = vmatprep.subr.mxu0 0.0
  %140 = vmatpush2.xpose.msra.mxu0 0.0
  %141 = vmatprep.subr.mxu0 0.0
  %142 = vmatpush2.xpose.msra.mxu0 0.0
  %143 = vmatprep.subr.mxu0 0.0
  %144 = vmatpush2.xpose.msra.mxu0 0.0
  %145 = vmatprep.subr.mxu0 0.0
  %146 = vmatpush2.xpose.msra.mxu0 0.0
  %147 = vmatprep.subr.mxu0 0.0
  %148 = vmatpush2.xpose.msra.mxu0 0.0
  %149 = vmatprep.subr.mxu0 0.0
  %150 = vmatpush2.xpose.msra.mxu0 0.0
  %151 = vmatprep.subr.mxu0 0.0
  %152 = vmatpush2.xpose.msra.mxu0 0.0
  %153 = vmatprep.subr.mxu0 0.0
  %154 = vmatpush2.xpose.msra.mxu0 0.0
  %155 = vmatprep.subr.mxu0 0.0
  %156 = vmatpush2.xpose.msra.mxu0 0.0
  %157 = vmatprep.subr.mxu0 0.0
  %158 = vmatpush2.xpose.msra.mxu0 0.0
  %159 = vmatprep.subr.mxu0 0.0
  %160 = vmatpush2.xpose.msra.mxu0 0.0
  %161 = vmatprep.subr.mxu0 0.0
  %162 = vmatpush2.xpose.msra.mxu0 0.0
  %163 = vmatprep.mubr.f32.mxu0 0.0
  %164 = vmatmul.mubr.f32.gmra.mxu0 %v46
  %v165 = vpop.f32.mrf.mxu0
  %v166 = vadd.f32 %v37, %v165
  %v167 = vpop.f32.mrf.mxu0
  %168 = vmatprep.mubr.f32.mxu0 0.0
  %169 = vmatmul.mubr.f32.gmra.mxu0 %v49
  %v170 = vpop.f32.mrf.mxu0
  %v171 = vadd.f32 %v42, %v170
  %v172 = vpop.f32.mrf.mxu0
  %173 = vdwg.mxu0
  %v174 = vxor.u32 %v166, 2147483648
  %v175 = vxor.u32 %v171, 2147483648
  %v176 = vmul.f32 %v174, 1.442695
  %v177 = vpow.pop %v176
  %v178 = vmul.f32 %v175, 1.442695
  %v179 = vpow.pop %v178
  %v180 = vadd.f32 %v177, 1.0
  %v181 = vadd.f32 %v179, 1.0
  %v182 = vrcp.pop %v180
  %v183 = vmul.f32 1.0, %v182
  %v184 = vrcp.pop %v181
  %v185 = vmul.f32 1.0, %v184
  %186 = vst [vmem:[%s3] sm:$0xff] %v183
  %187 = vst [vmem:[%s3 + $0x8] sm:$0xff] %v185
  // Predicated region
  $region14: #{starting_network_folded.1} parent=0 // pred_check
    _
  $region15: #{starting_network_folded.1} parent=0 // pred_check_branch
    %189 = sbr.rel (0) target = $region17
  $region16: #{starting_network_folded.1} parent=0 // pred_region
    _
  $region17: #{starting_network_folded.1} parent=0 // pred_fallthru
    _
  // Predicated region
  $region18: #{starting_network_folded.1} parent=0 // pred_check
    _
  $region19: #{starting_network_folded.1} parent=0 // pred_check_branch
    %191 = sbr.rel (0) target = $region21
  $region20: #{starting_network_folded.1} parent=0 // pred_region
    _
  $region21: #{starting_network_folded.1} parent=0 // pred_fallthru
    _

</llo_original>
